<compile_context>
chip_gen: v7x
topology: tpu7x:2x2x1
jax: 0.10.0
libtpu: 0.0.40
codegen_flags: <defaults>
</compile_context>

<pallas_src>
import jax
import jax.numpy as jnp
from jax.experimental import pallas as pl
from jax.experimental.pallas import tpu as pltpu


def soft_attention_kernel(h_ref, asp_ref, wh_ref, wv_ref, wp_ref, wx_ref,
                          w1_ref, w2_ref, out_ref):
    """One grid step == TB batch elements."""
    TB, S, H = h_ref.shape
    E = asp_ref.shape[2]

    h3 = h_ref[...].astype(jnp.float32)                      # (TB, S, H)
    h2 = h3.reshape(TB * S, H)                               # merge leading dims
    a2 = asp_ref[...].astype(jnp.float32).reshape(TB * S, E)

    # Projections as single matmuls over all TB*S rows (MXU).
    thx = jnp.tanh(jnp.dot(h2, wh_ref[...],
                           preferred_element_type=jnp.float32)).reshape(TB, S, H)
    tvx = jnp.tanh(jnp.dot(a2, wv_ref[...],
                           preferred_element_type=jnp.float32)).reshape(TB, S, E)

    # tanh(cat(hx, vx)) @ weight == tanh(hx)@weight[:H] + tanh(vx)@weight[H:]
    # (tanh is elementwise, so the concat can be split).  Scores kept lane-major
    # as (TB, S) so the softmax reductions are lane (axis=-1) reductions.
    s = (jnp.sum(thx * w1_ref[...], axis=-1)
         + jnp.sum(tvx * w2_ref[...], axis=-1))              # (TB, S)

    # Numerically stable softmax over the sequence (lane) axis.  Exact divide
    # (not approx reciprocal) so we match the reference to float32 precision.
    s = s - jnp.max(s, axis=-1, keepdims=True)
    e = jnp.exp(s)
    ax = e / jnp.sum(e, axis=-1, keepdims=True)              # (TB, S)

    # Attention-weighted sum over the sequence: rx[b] = sum_s ax[b,s] * h[b,s,:]
    rx = jnp.sum(ax[:, :, None] * h3, axis=1)                # (TB, H)
    hn = h3[:, S - 1, :]                                     # (TB, H)

    # Final projections with M=TB rows.  (Kept as two small dots instead of a
    # fused [rx, hn] @ [Wp^T; Wx^T] to avoid an in-kernel lane concat at H=32.)
    hs = jnp.tanh(
        jnp.dot(rx, wp_ref[...], preferred_element_type=jnp.float32)
        + jnp.dot(hn, wx_ref[...], preferred_element_type=jnp.float32))  # (TB, H)

    out_ref[...] = hs.astype(out_ref.dtype)


def _pick_block_b(B, S, target_rows=256):
    """Batch rows per grid step: aim for TB*S ~ target_rows MXU rows, keep the
    output block sublane-dense (TB % 8 == 0) and >= 2 grid steps when possible
    (so v7x's two TensorCores both get work)."""
    if B <= 8:
        return B
    tb = min(B, max(8, target_rows // max(S, 1)))
    tb = max(8, (tb // 8) * 8)
    while tb > 8 and pl.cdiv(B, tb) < 2:
        tb = max(8, ((tb // 2) // 8) * 8)
    return tb


def soft_attention(h, aspect, w_h, w_v, w_p, w_x, weight, *, block_b=None):
    """h: (B,S,H); aspect: (B,S,E); w_*: PyTorch-style (out,in); weight: (H+E,)."""
    B, S, H = h.shape
    E = aspect.shape[-1]

    tb = _pick_block_b(B, S) if block_b is None else block_b
    n_blocks = pl.cdiv(B, tb)
    b_pad = n_blocks * tb
    if b_pad != B:
        h = jnp.pad(h, ((0, b_pad - B), (0, 0), (0, 0)))
        aspect = jnp.pad(aspect, ((0, b_pad - B), (0, 0), (0, 0)))

    # Pre-transpose linears (glue); split the score vector into its H / E halves.
    wh_t, wv_t, wp_t, wx_t = w_h.T, w_v.T, w_p.T, w_x.T
    w1 = weight[:H].reshape(1, H)
    w2 = weight[H:].reshape(1, E)

    out = pl.pallas_call(
        soft_attention_kernel,
        out_shape=jax.ShapeDtypeStruct((b_pad, H), h.dtype),
        grid_spec=pltpu.PrefetchScalarGridSpec(
            num_scalar_prefetch=0,
            grid=(n_blocks,),
            in_specs=[
                pl.BlockSpec((tb, S, H), lambda b: (b, 0, 0)),
                pl.BlockSpec((tb, S, E), lambda b: (b, 0, 0)),
                pl.BlockSpec((H, H), lambda b: (0, 0)),
                pl.BlockSpec((E, E), lambda b: (0, 0)),
                pl.BlockSpec((H, H), lambda b: (0, 0)),
                pl.BlockSpec((H, H), lambda b: (0, 0)),
                pl.BlockSpec((1, H), lambda b: (0, 0)),
                pl.BlockSpec((1, E), lambda b: (0, 0)),
            ],
            out_specs=pl.BlockSpec((tb, H), lambda b: (b, 0)),
        ),
        compiler_params=pltpu.CompilerParams(
            dimension_semantics=("parallel",),
        ),
    )(h, aspect, wh_t, wv_t, wp_t, wx_t, w1, w2)
    return out[:B]


def soft_attention_ref(h, aspect, w_h, w_v, w_p, w_x, weight):
    """Pure-JAX reference mirroring the PyTorch forward."""
    hx = h @ w_h.T
    vx = aspect @ w_v.T
    hv = jnp.tanh(jnp.concatenate((hx, vx), axis=-1))
    ax = jax.nn.softmax(hv @ weight, axis=-1)[:, None, :]    # (B, 1, S)
    rx = jnp.squeeze(ax @ h, axis=1)                         # (B, H)
    hn = h[:, -1, :]
    return jnp.tanh(rx @ w_p.T + hn @ w_x.T)


if __name__ == "__main__":
    H, E, S = 32, 32, 8
    key = jax.random.PRNGKey(0)
    k = jax.random.split(key, 5)

    # Deterministic parameter init (PyTorch nn.Linear weight shape = (out, in)).
    w_h = jax.random.normal(k[0], (H, H), dtype=jnp.float32) * 0.1
    w_v = jax.random.normal(k[1], (E, E), dtype=jnp.float32) * 0.1
    w_p = jax.random.normal(k[2], (H, H), dtype=jnp.float32) * 0.1
    w_x = jax.random.normal(k[3], (H, H), dtype=jnp.float32) * 0.1
    weight = jax.random.normal(k[4], (H + E,), dtype=jnp.float32) * 0.1

    # Small case (B=2) plus a case that exercises TB>1 blocking and batch padding.
    for B in (2, 50):
        kh, ka = jax.random.split(jax.random.fold_in(key, B))
        h = jax.random.normal(kh, (B, S, H), dtype=jnp.float32)
        aspect = jax.random.normal(ka, (B, S, E), dtype=jnp.float32)

        out = soft_attention(h, aspect, w_h, w_v, w_p, w_x, weight)
        out = jax.block_until_ready(out)
        ref = soft_attention_ref(h, aspect, w_h, w_v, w_p, w_x, weight)

        assert out.shape == (B, H)
        assert jnp.allclose(out, ref, rtol=5e-3, atol=1e-3), (
            f"mismatch at B={B}: max abs err "
            f"{float(jnp.max(jnp.abs(out - ref))):.3e}")

    print("KERNEL_OK")
</pallas_src>

<mosaic_0001>
module attributes {stable_mosaic.version = 11 : i64} {
  func.func @soft_attention_kernel(%arg0: i32, %arg1: memref<2x8x32xf32, #tpu.memory_space<vmem>>, %arg2: memref<2x8x32xf32, #tpu.memory_space<vmem>>, %arg3: memref<32x32xf32, #tpu.memory_space<vmem>>, %arg4: memref<32x32xf32, #tpu.memory_space<vmem>>, %arg5: memref<32x32xf32, #tpu.memory_space<vmem>>, %arg6: memref<32x32xf32, #tpu.memory_space<vmem>>, %arg7: memref<1x32xf32, #tpu.memory_space<vmem>>, %arg8: memref<1x32xf32, #tpu.memory_space<vmem>>, %arg9: memref<2x32xf32, #tpu.memory_space<vmem>>) attributes {dimension_semantics = [#tpu.dimension_semantics<parallel>], iteration_bounds = array<i64: 1>, scalar_prefetch = 0 : i64, scratch_operands = 0 : i64, tpu.core_type = #tpu.core_type<tc>, window_params = [{transform_indices = @transform_0, window_bounds = array<i64: 2, 8, 32>}, {transform_indices = @transform_1, window_bounds = array<i64: 2, 8, 32>}, {pipeline_mode = #tpu.pipeline_mode<synchronous>, transform_indices = @transform_2, window_bounds = array<i64: 32, 32>}, {pipeline_mode = #tpu.pipeline_mode<synchronous>, transform_indices = @transform_3, window_bounds = array<i64: 32, 32>}, {pipeline_mode = #tpu.pipeline_mode<synchronous>, transform_indices = @transform_4, window_bounds = array<i64: 32, 32>}, {pipeline_mode = #tpu.pipeline_mode<synchronous>, transform_indices = @transform_5, window_bounds = array<i64: 32, 32>}, {pipeline_mode = #tpu.pipeline_mode<synchronous>, transform_indices = @transform_6, window_bounds = array<i64: 1, 32>}, {pipeline_mode = #tpu.pipeline_mode<synchronous>, transform_indices = @transform_7, window_bounds = array<i64: 1, 32>}, {transform_indices = @transform_8, window_bounds = array<i64: 2, 32>}]} {
    %c0 = arith.constant 0 : index
    %c0_0 = arith.constant 0 : index
    %c0_1 = arith.constant 0 : index
    %0 = vector.load %arg1[%c0, %c0_0, %c0_1] : memref<2x8x32xf32, #tpu.memory_space<vmem>>, vector<2x8x32xf32>
    %1 = vector.shape_cast %0 : vector<2x8x32xf32> to vector<16x32xf32>
    %c0_2 = arith.constant 0 : index
    %c0_3 = arith.constant 0 : index
    %c0_4 = arith.constant 0 : index
    %2 = vector.load %arg2[%c0_2, %c0_3, %c0_4] : memref<2x8x32xf32, #tpu.memory_space<vmem>>, vector<2x8x32xf32>
    %3 = vector.shape_cast %2 : vector<2x8x32xf32> to vector<16x32xf32>
    %c0_5 = arith.constant 0 : index
    %c0_6 = arith.constant 0 : index
    %4 = vector.load %arg3[%c0_5, %c0_6] : memref<32x32xf32, #tpu.memory_space<vmem>>, vector<32x32xf32>
    %cst = arith.constant dense<0.000000e+00> : vector<16x32xf32>
    %5 = tpu.matmul %1, %4, %cst {dimension_numbers = #tpu.dot_dimension_numbers<[1], [0], [0], [1], [0, 0, 1, 1], [], []>} : vector<16x32xf32>, vector<32x32xf32>, vector<16x32xf32> -> vector<16x32xf32>
    %6 = math.tanh %5 : vector<16x32xf32>
    %7 = vector.shape_cast %6 : vector<16x32xf32> to vector<2x8x32xf32>
    %c0_7 = arith.constant 0 : index
    %c0_8 = arith.constant 0 : index
    %8 = vector.load %arg4[%c0_7, %c0_8] : memref<32x32xf32, #tpu.memory_space<vmem>>, vector<32x32xf32>
    %cst_9 = arith.constant dense<0.000000e+00> : vector<16x32xf32>
    %9 = tpu.matmul %3, %8, %cst_9 {dimension_numbers = #tpu.dot_dimension_numbers<[1], [0], [0], [1], [0, 0, 1, 1], [], []>} : vector<16x32xf32>, vector<32x32xf32>, vector<16x32xf32> -> vector<16x32xf32>
    %10 = math.tanh %9 : vector<16x32xf32>
    %11 = vector.shape_cast %10 : vector<16x32xf32> to vector<2x8x32xf32>
    %c0_10 = arith.constant 0 : index
    %c0_11 = arith.constant 0 : index
    %12 = vector.load %arg7[%c0_10, %c0_11] : memref<1x32xf32, #tpu.memory_space<vmem>>, vector<1x32xf32>
    %13 = vector.shape_cast %12 : vector<1x32xf32> to vector<1x1x32xf32>
    %14 = vector.broadcast %13 : vector<1x1x32xf32> to vector<2x8x32xf32>
    %15 = arith.mulf %7, %14 : vector<2x8x32xf32>
    %cst_12 = arith.constant dense<0.000000e+00> : vector<2x8xf32>
    %16 = vector.multi_reduction <add>, %15, %cst_12 [2] : vector<2x8x32xf32> to vector<2x8xf32>
    %c0_13 = arith.constant 0 : index
    %c0_14 = arith.constant 0 : index
    %17 = vector.load %arg8[%c0_13, %c0_14] : memref<1x32xf32, #tpu.memory_space<vmem>>, vector<1x32xf32>
    %18 = vector.shape_cast %17 : vector<1x32xf32> to vector<1x1x32xf32>
    %19 = vector.broadcast %18 : vector<1x1x32xf32> to vector<2x8x32xf32>
    %20 = arith.mulf %11, %19 : vector<2x8x32xf32>
    %cst_15 = arith.constant dense<0.000000e+00> : vector<2x8xf32>
    %21 = vector.multi_reduction <add>, %20, %cst_15 [2] : vector<2x8x32xf32> to vector<2x8xf32>
    %22 = arith.addf %16, %21 : vector<2x8xf32>
    %cst_16 = arith.constant dense<0xFF800000> : vector<2xf32>
    %23 = vector.multi_reduction <maximumf>, %22, %cst_16 [1] : vector<2x8xf32> to vector<2xf32>
    %24 = vector.shape_cast %23 : vector<2xf32> to vector<2x1xf32>
    %25 = vector.broadcast %24 : vector<2x1xf32> to vector<2x8xf32>
    %26 = arith.subf %22, %25 : vector<2x8xf32>
    %27 = math.exp %26 : vector<2x8xf32>
    %cst_17 = arith.constant dense<0.000000e+00> : vector<2xf32>
    %28 = vector.multi_reduction <add>, %27, %cst_17 [1] : vector<2x8xf32> to vector<2xf32>
    %29 = vector.shape_cast %28 : vector<2xf32> to vector<2x1xf32>
    %30 = vector.broadcast %29 : vector<2x1xf32> to vector<2x8xf32>
    %31 = arith.divf %27, %30 : vector<2x8xf32>
    %32 = vector.shape_cast %31 : vector<2x8xf32> to vector<2x8x1xf32>
    %33 = vector.broadcast %32 : vector<2x8x1xf32> to vector<2x8x32xf32>
    %34 = arith.mulf %33, %0 : vector<2x8x32xf32>
    %cst_18 = arith.constant dense<0.000000e+00> : vector<2x32xf32>
    %35 = vector.multi_reduction <add>, %34, %cst_18 [1] : vector<2x8x32xf32> to vector<2x32xf32>
    %36 = vector.extract_strided_slice %0 {offsets = [0, 7, 0], sizes = [2, 1, 32], strides = [1, 1, 1]} : vector<2x8x32xf32> to vector<2x1x32xf32>
    %37 = vector.shape_cast %36 : vector<2x1x32xf32> to vector<2x32xf32>
    %c0_19 = arith.constant 0 : index
    %c0_20 = arith.constant 0 : index
    %38 = vector.load %arg5[%c0_19, %c0_20] : memref<32x32xf32, #tpu.memory_space<vmem>>, vector<32x32xf32>
    %cst_21 = arith.constant dense<0.000000e+00> : vector<2x32xf32>
    %39 = tpu.matmul %35, %38, %cst_21 {dimension_numbers = #tpu.dot_dimension_numbers<[1], [0], [0], [1], [0, 0, 1, 1], [], []>} : vector<2x32xf32>, vector<32x32xf32>, vector<2x32xf32> -> vector<2x32xf32>
    %c0_22 = arith.constant 0 : index
    %c0_23 = arith.constant 0 : index
    %40 = vector.load %arg6[%c0_22, %c0_23] : memref<32x32xf32, #tpu.memory_space<vmem>>, vector<32x32xf32>
    %cst_24 = arith.constant dense<0.000000e+00> : vector<2x32xf32>
    %41 = tpu.matmul %37, %40, %cst_24 {dimension_numbers = #tpu.dot_dimension_numbers<[1], [0], [0], [1], [0, 0, 1, 1], [], []>} : vector<2x32xf32>, vector<32x32xf32>, vector<2x32xf32> -> vector<2x32xf32>
    %42 = arith.addf %39, %41 : vector<2x32xf32>
    %43 = math.tanh %42 : vector<2x32xf32>
    %c0_25 = arith.constant 0 : index
    %c0_26 = arith.constant 0 : index
    %44 = vector.load %arg9[%c0_25, %c0_26] : memref<2x32xf32, #tpu.memory_space<vmem>>, vector<2x32xf32>
    tpu.vector_store %arg9[%c0_25, %c0_26], %43 {strides = array<i32>} : memref<2x32xf32, #tpu.memory_space<vmem>>, vector<2x32xf32>,
    return
  }
  func.func @transform_0(%arg0: i32) -> (i32, i32, i32) {
    %c0_i32 = arith.constant 0 : i32
    %c0_i32_0 = arith.constant 0 : i32
    %c0_i32_1 = arith.constant 0 : i32
    return %arg0, %c0_i32, %c0_i32_0 : i32, i32, i32
  }
  func.func @transform_1(%arg0: i32) -> (i32, i32, i32) {
    %c0_i32 = arith.constant 0 : i32
    %c0_i32_0 = arith.constant 0 : i32
    %c0_i32_1 = arith.constant 0 : i32
    return %arg0, %c0_i32, %c0_i32_0 : i32, i32, i32
  }
  func.func @transform_2(%arg0: i32) -> (i32, i32) {
    %c0_i32 = arith.constant 0 : i32
    %c0_i32_0 = arith.constant 0 : i32
    %c0_i32_1 = arith.constant 0 : i32
    return %c0_i32, %c0_i32_0 : i32, i32
  }
  func.func @transform_3(%arg0: i32) -> (i32, i32) {
    %c0_i32 = arith.constant 0 : i32
    %c0_i32_0 = arith.constant 0 : i32
    %c0_i32_1 = arith.constant 0 : i32
    return %c0_i32, %c0_i32_0 : i32, i32
  }
  func.func @transform_4(%arg0: i32) -> (i32, i32) {
    %c0_i32 = arith.constant 0 : i32
    %c0_i32_0 = arith.constant 0 : i32
    %c0_i32_1 = arith.constant 0 : i32
    return %c0_i32, %c0_i32_0 : i32, i32
  }
  func.func @transform_5(%arg0: i32) -> (i32, i32) {
    %c0_i32 = arith.constant 0 : i32
    %c0_i32_0 = arith.constant 0 : i32
    %c0_i32_1 = arith.constant 0 : i32
    return %c0_i32, %c0_i32_0 : i32, i32
  }
  func.func @transform_6(%arg0: i32) -> (i32, i32) {
    %c0_i32 = arith.constant 0 : i32
    %c0_i32_0 = arith.constant 0 : i32
    %c0_i32_1 = arith.constant 0 : i32
    return %c0_i32, %c0_i32_0 : i32, i32
  }
  func.func @transform_7(%arg0: i32) -> (i32, i32) {
    %c0_i32 = arith.constant 0 : i32
    %c0_i32_0 = arith.constant 0 : i32
    %c0_i32_1 = arith.constant 0 : i32
    return %c0_i32, %c0_i32_0 : i32, i32
  }
  func.func @transform_8(%arg0: i32) -> (i32, i32) {
    %c0_i32 = arith.constant 0 : i32
    %c0_i32_0 = arith.constant 0 : i32
    return %arg0, %c0_i32 : i32, i32
  }
}

</mosaic_0001>

<llo_original>
// kernel: tpu_custom_call.1
$region0: #{tpu_custom_call.1}
  #allocation0 [shape = 'u32[]', space=smem, size = 0x4, offset = 0x4, fixed_abs, tag = 'smem constant byte address 0x4 - core index']
  #allocation1 [shape = 'u32[144,128]{1,0:T(1,128)}', space=vmem, size = 0x12000, scoped, tag = 'internal scratch']
  %s0 = inlined_call_operand.hbm [shape: f32[2,8,32], index: 0, kind: input, shape index: {}]
  %s1 = inlined_call_operand.hbm [shape: f32[2,8,32], index: 1, kind: input, shape index: {}]
  %s2 = inlined_call_operand.hbm [shape: f32[32,32], index: 2, kind: input, shape index: {}]
  %s3 = inlined_call_operand.hbm [shape: f32[32,32], index: 3, kind: input, shape index: {}]
  %s4 = inlined_call_operand.hbm [shape: f32[32,32], index: 4, kind: input, shape index: {}]
  %s5 = inlined_call_operand.hbm [shape: f32[32,32], index: 5, kind: input, shape index: {}]
  %s6 = inlined_call_operand.vmem [shape: f32[1,32], index: 6, kind: input, shape index: {}]
  %s7 = inlined_call_operand.vmem [shape: f32[1,32], index: 7, kind: input, shape index: {}]
  %s8 = inlined_call_operand.hbm [shape: f32[2,32], index: 8, kind: output, shape index: {}]
  %s9 = sld [smem:[#allocation0]]
  $region66: #{tpu_custom_call.1} parent=0
    _
  %s11 = ssub.s32 1, %s9
  %s12 = scalar_select 0, %s11, %s9
  $region1: #{tpu_custom_call.1} parent=0
    #allocation2 [shape = 'u8[8192]{0}', space=vmem, size = 0x2000, scoped, tag = 'input window, operand 0, single buffered']
    #allocation3 [shape = 's32[1]{0}', space=sflag, size = 0x4, scoped, tag = 'scoped memory for tpu_custom_call.1']
    #allocation4 [shape = 's32[1]{0}', space=sflag, size = 0x4, scoped, tag = 'scoped memory for tpu_custom_call.1']
    #allocation5 [shape = 'u8[8192]{0}', space=vmem, size = 0x2000, scoped, tag = 'input window, operand 1, single buffered']
    #allocation6 [shape = 's32[1]{0}', space=sflag, size = 0x4, scoped, tag = 'scoped memory for tpu_custom_call.1']
    #allocation7 [shape = 'u8[16384]{0}', space=vmem, size = 0x4000, scoped, tag = 'input window, operand 2, single buffered']
    #allocation8 [shape = 'u8[16384]{0}', space=vmem, size = 0x4000, scoped, tag = 'input window, operand 3, single buffered']
    #allocation9 [shape = 's32[1]{0}', space=sflag, size = 0x4, scoped, tag = 'scoped memory for tpu_custom_call.1']
    #allocation10 [shape = 'u8[16384]{0}', space=vmem, size = 0x4000, scoped, tag = 'input window, operand 4, single buffered']
    #allocation11 [shape = 'u8[16384]{0}', space=vmem, size = 0x4000, scoped, tag = 'input window, operand 5, single buffered']
    #allocation12 [shape = 's32[1]{0}', space=sflag, size = 0x4, scoped, tag = 'scoped memory for tpu_custom_call.1']
    #allocation13 [shape = 'u8[1024]{0}', space=vmem, size = 0x400, scoped, tag = 'output window, operand 0, single buffered']
    %13 = vsyncpa [#allocation3], 0
    %14 = vsyncpa [#allocation6], 0
    %15 = vsyncpa [#allocation9], 0
    %16 = vsyncpa [#allocation12], 0
    %17 = vsyncpa [#allocation4], 0
    // Predicated region
    $region2: #{tpu_custom_call.1} parent=1 // pred_check
      _
    $region3: #{tpu_custom_call.1} parent=1 // pred_check_branch
      %19 = sbr.rel (0) target = $region5
    $region4: #{tpu_custom_call.1} parent=1 // pred_region
      %s21 = ssub.s32 256, 256
      %22 = vsyncadd [#allocation3], %s21
      %s23 = sshll.u32 [#allocation2], 4
      %s24 = int_to_ptr.vmem [resolvable:$true] %s23
      %29 = dma.hbm_to_vmem [thread:$0]  %s0, 256, %s24, [#allocation3], 128, 128, 8
    $region5: #{tpu_custom_call.1} parent=1 // pred_fallthru
      _
    // Predicated region
    $region6: #{tpu_custom_call.1} parent=1 // pred_check
      _
    $region7: #{tpu_custom_call.1} parent=1 // pred_check_branch
      %31 = sbr.rel (0) target = $region9
    $region8: #{tpu_custom_call.1} parent=1 // pred_region
      %s33 = ssub.s32 256, 256
      %34 = vsyncadd [#allocation6], %s33
      %s35 = sshll.u32 [#allocation5], 4
      %s36 = int_to_ptr.vmem [resolvable:$true] %s35
      %41 = dma.hbm_to_vmem [thread:$0]  %s1, 256, %s36, [#allocation6], 128, 128, 8
    $region9: #{tpu_custom_call.1} parent=1 // pred_fallthru
      _
    // Predicated region
    $region10: #{tpu_custom_call.1} parent=1 // pred_check
      _
    $region11: #{tpu_custom_call.1} parent=1 // pred_check_branch
      %43 = sbr.rel (0) target = $region13
    $region12: #{tpu_custom_call.1} parent=1 // pred_region
      %s45 = ssub.s32 512, 512
      %46 = vsyncadd [#allocation6], %s45
      %s47 = sshll.u32 [#allocation7], 4
      %s48 = int_to_ptr.vmem [resolvable:$true] %s47
      %53 = dma.hbm_to_vmem [thread:$0]  %s2, 512, %s48, [#allocation6], 128, 128, 8
    $region13: #{tpu_custom_call.1} parent=1 // pred_fallthru
      _
    // Predicated region
    $region14: #{tpu_custom_call.1} parent=1 // pred_check
      _
    $region15: #{tpu_custom_call.1} parent=1 // pred_check_branch
      %55 = sbr.rel (0) target = $region17
    $region16: #{tpu_custom_call.1} parent=1 // pred_region
      %s57 = ssub.s32 512, 512
      %58 = vsyncadd [#allocation9], %s57
      %s59 = sshll.u32 [#allocation8], 4
      %s60 = int_to_ptr.vmem [resolvable:$true] %s59
      %65 = dma.hbm_to_vmem [thread:$0]  %s3, 512, %s60, [#allocation9], 128, 128, 8
    $region17: #{tpu_custom_call.1} parent=1 // pred_fallthru
      _
    // Predicated region
    $region18: #{tpu_custom_call.1} parent=1 // pred_check
      _
    $region19: #{tpu_custom_call.1} parent=1 // pred_check_branch
      %67 = sbr.rel (0) target = $region21
    $region20: #{tpu_custom_call.1} parent=1 // pred_region
      %s69 = ssub.s32 512, 512
      %70 = vsyncadd [#allocation9], %s69
      %s71 = sshll.u32 [#allocation10], 4
      %s72 = int_to_ptr.vmem [resolvable:$true] %s71
      %77 = dma.hbm_to_vmem [thread:$0]  %s4, 512, %s72, [#allocation9], 128, 128, 8
    $region21: #{tpu_custom_call.1} parent=1 // pred_fallthru
      _
    // Predicated region
    $region22: #{tpu_custom_call.1} parent=1 // pred_check
      _
    $region23: #{tpu_custom_call.1} parent=1 // pred_check_branch
      %79 = sbr.rel (0) target = $region25
    $region24: #{tpu_custom_call.1} parent=1 // pred_region
      %s81 = ssub.s32 512, 512
      %82 = vsyncadd [#allocation12], %s81
      %s83 = sshll.u32 [#allocation11], 4
      %s84 = int_to_ptr.vmem [resolvable:$true] %s83
      %89 = dma.hbm_to_vmem [thread:$0]  %s5, 512, %s84, [#allocation12], 128, 128, 8
    $region25: #{tpu_custom_call.1} parent=1 // pred_fallthru
      _
    // Predicated region
    $region26: #{tpu_custom_call.1} parent=1 // pred_check
      _
    $region27: #{tpu_custom_call.1} parent=1 // pred_check_branch
      %91 = sbr.rel (0) target = $region29
    $region28: #{tpu_custom_call.1} parent=1 // pred_region
      _
    $region29: #{tpu_custom_call.1} parent=1 // pred_fallthru
      _
    // Predicated region
    $region30: #{tpu_custom_call.1} parent=1 // pred_check
      _
    $region31: #{tpu_custom_call.1} parent=1 // pred_check_branch
      %93 = sbr.rel (0) target = $region33
    $region32: #{tpu_custom_call.1} parent=1 // pred_region
      _
    $region33: #{tpu_custom_call.1} parent=1 // pred_fallthru
      _
    // Predicated region
    $region34: #{tpu_custom_call.1} parent=1 // pred_check
      _
    $region35: #{tpu_custom_call.1} parent=1 // pred_check_branch
      %95 = sbr.rel (0) target = $region37
    $region36: #{tpu_custom_call.1} parent=1 // pred_region
      %96 = dma.done [#allocation3], 256
    $region37: #{tpu_custom_call.1} parent=1 // pred_fallthru
      _
    // Predicated region
    $region38: #{tpu_custom_call.1} parent=1 // pred_check
      _
    $region39: #{tpu_custom_call.1} parent=1 // pred_check_branch
      %98 = sbr.rel (0) target = $region41
    $region40: #{tpu_custom_call.1} parent=1 // pred_region
      %99 = dma.done [#allocation6], 256
    $region41: #{tpu_custom_call.1} parent=1 // pred_fallthru
      _
    // Predicated region
    $region42: #{tpu_custom_call.1} parent=1 // pred_check
      _
    $region43: #{tpu_custom_call.1} parent=1 // pred_check_branch
      %101 = sbr.rel (0) target = $region45
    $region44: #{tpu_custom_call.1} parent=1 // pred_region
      %102 = dma.done [#allocation6], 512
    $region45: #{tpu_custom_call.1} parent=1 // pred_fallthru
      _
    // Predicated region
    $region46: #{tpu_custom_call.1} parent=1 // pred_check
      _
    $region47: #{tpu_custom_call.1} parent=1 // pred_check_branch
      %104 = sbr.rel (0) target = $region49
    $region48: #{tpu_custom_call.1} parent=1 // pred_region
      %105 = dma.done [#allocation9], 512
    $region49: #{tpu_custom_call.1} parent=1 // pred_fallthru
      _
    // Predicated region
    $region50: #{tpu_custom_call.1} parent=1 // pred_check
      _
    $region51: #{tpu_custom_call.1} parent=1 // pred_check_branch
      %107 = sbr.rel (0) target = $region53
    $region52: #{tpu_custom_call.1} parent=1 // pred_region
      %108 = dma.done [#allocation9], 512
    $region53: #{tpu_custom_call.1} parent=1 // pred_fallthru
      _
    // Predicated region
    $region54: #{tpu_custom_call.1} parent=1 // pred_check
      _
    $region55: #{tpu_custom_call.1} parent=1 // pred_check_branch
      %110 = sbr.rel (0) target = $region57
    $region56: #{tpu_custom_call.1} parent=1 // pred_region
      %111 = dma.done [#allocation12], 512
    $region57: #{tpu_custom_call.1} parent=1 // pred_fallthru
      _
    %v112 = vld [vmem:[#allocation2] sm:$0xff]
    %v113 = vld [vmem:[#allocation2 + $0x8] sm:$0xff]
    %v114 = vld [vmem:[#allocation5] sm:$0xff]
    %v115 = vld [vmem:[#allocation5 + $0x8] sm:$0xff]
    %v116 = vld [vmem:[#allocation7] sm:$0xff]
    %v117 = vld [vmem:[#allocation7 + $0x8] sm:$0xff]
    %v118 = vld [vmem:[#allocation7 + $0x10] sm:$0xff]
    %v119 = vld [vmem:[#allocation7 + $0x18] sm:$0xff]
    %vm120 = vcmask 261120
    %v122 = vsel %vm120, %v112, 0
    %v125 = vsel %vm120, %v113, 0
    %127 = vmatprep.subr.mxu0 0.0
    %128 = vmatpush1.msra.mxu0 %v116
    %129 = vmatprep.subr.mxu0 0.0
    %130 = vmatpush1.msra.mxu0 %v117
    %131 = vmatprep.subr.mxu0 0.0
    %132 = vmatpush1.msra.mxu0 %v118
    %133 = vmatprep.subr.mxu0 0.0
    %134 = vmatpush1.msra.mxu0 %v119
    %135 = vmatprep.subr.mxu0 0.0
    %136 = vmatpush1.msra.mxu0 0.0
    %137 = vmatprep.subr.mxu0 0.0
    %138 = vmatpush1.msra.mxu0 0.0
    %139 = vmatprep.subr.mxu0 0.0
    %140 = vmatpush1.msra.mxu0 0.0
    %141 = vmatprep.subr.mxu0 0.0
    %142 = vmatpush1.msra.mxu0 0.0
    %143 = vmatprep.subr.mxu0 0.0
    %144 = vmatpush1.msra.mxu0 0.0
    %145 = vmatprep.subr.mxu0 0.0
    %146 = vmatpush1.msra.mxu0 0.0
    %147 = vmatprep.subr.mxu0 0.0
    %148 = vmatpush1.msra.mxu0 0.0
    %149 = vmatprep.subr.mxu0 0.0
    %150 = vmatpush1.msra.mxu0 0.0
    %151 = vmatprep.subr.mxu0 0.0
    %152 = vmatpush1.msra.mxu0 0.0
    %153 = vmatprep.subr.mxu0 0.0
    %154 = vmatpush1.msra.mxu0 0.0
    %155 = vmatprep.subr.mxu0 0.0
    %156 = vmatpush1.msra.mxu0 0.0
    %157 = vmatprep.subr.mxu0 0.0
    %158 = vmatpush1.msra.mxu0 0.0
    %159 = vmatprep.subr.mxu0 0.0
    %160 = vmatpush1.msra.mxu0 0.0
    %161 = vmatprep.subr.mxu0 0.0
    %162 = vmatpush1.msra.mxu0 0.0
    %163 = vmatprep.subr.mxu0 0.0
    %164 = vmatpush1.msra.mxu0 0.0
    %165 = vmatprep.subr.mxu0 0.0
    %166 = vmatpush1.msra.mxu0 0.0
    %167 = vmatprep.subr.mxu0 0.0
    %168 = vmatpush1.msra.mxu0 0.0
    %169 = vmatprep.subr.mxu0 0.0
    %170 = vmatpush1.msra.mxu0 0.0
    %171 = vmatprep.subr.mxu0 0.0
    %172 = vmatpush1.msra.mxu0 0.0
    %173 = vmatprep.subr.mxu0 0.0
    %174 = vmatpush1.msra.mxu0 0.0
    %175 = vmatprep.subr.mxu0 0.0
    %176 = vmatpush1.msra.mxu0 0.0
    %177 = vmatprep.subr.mxu0 0.0
    %178 = vmatpush1.msra.mxu0 0.0
    %179 = vmatprep.subr.mxu0 0.0
    %180 = vmatpush1.msra.mxu0 0.0
    %181 = vmatprep.subr.mxu0 0.0
    %182 = vmatpush1.msra.mxu0 0.0
    %183 = vmatprep.subr.mxu0 0.0
    %184 = vmatpush1.msra.mxu0 0.0
    %185 = vmatprep.subr.mxu0 0.0
    %186 = vmatpush1.msra.mxu0 0.0
    %187 = vmatprep.subr.mxu0 0.0
    %188 = vmatpush1.msra.mxu0 0.0
    %189 = vmatprep.subr.mxu0 0.0
    %190 = vmatpush1.msra.mxu0 0.0
    %191 = vmatprep.mubr.f32.mxu0 0.0
    %192 = vmatmul.mubr.f32.gmra.mrb[0].mxu0 %v122
    %v193 = vpop.f32.mrb[0].mxu0
    %v194 = vadd.f32 0.0, %v193
    %v195 = vpop.f32.mrb[0].mxu0
    %196 = vmatprep.mubr.f32.mxu0 0.0
    %197 = vmatmul.mubr.f32.gmra.mrb[0].mxu0 %v125
    %v198 = vpop.f32.mrb[0].mxu0
    %v199 = vadd.f32 0.0, %v198
    %v200 = vpop.f32.mrb[0].mxu0
    %201 = vdwg.mxu0
    %v202 = vtanh.pop %v194
    %v203 = vtanh.pop %v199
    %v204 = vld [vmem:[#allocation8] sm:$0xff]
    %v205 = vld [vmem:[#allocation8 + $0x8] sm:$0xff]
    %v206 = vld [vmem:[#allocation8 + $0x10] sm:$0xff]
    %v207 = vld [vmem:[#allocation8 + $0x18] sm:$0xff]
    %v209 = vsel %vm120, %v114, 0
    %v212 = vsel %vm120, %v115, 0
    %214 = vmatprep.subr.mxu0 0.0
    %215 = vmatpush1.msra.mxu0 %v204
    %216 = vmatprep.subr.mxu0 0.0
    %217 = vmatpush1.msra.mxu0 %v205
    %218 = vmatprep.subr.mxu0 0.0
    %219 = vmatpush1.msra.mxu0 %v206
    %220 = vmatprep.subr.mxu0 0.0
    %221 = vmatpush1.msra.mxu0 %v207
    %222 = vmatprep.subr.mxu0 0.0
    %223 = vmatpush1.msra.mxu0 0.0
    %224 = vmatprep.subr.mxu0 0.0
    %225 = vmatpush1.msra.mxu0 0.0
    %226 = vmatprep.subr.mxu0 0.0
    %227 = vmatpush1.msra.mxu0 0.0
    %228 = vmatprep.subr.mxu0 0.0
    %229 = vmatpush1.msra.mxu0 0.0
    %230 = vmatprep.subr.mxu0 0.0
    %231 = vmatpush1.msra.mxu0 0.0
    %232 = vmatprep.subr.mxu0 0.0
    %233 = vmatpush1.msra.mxu0 0.0
    %234 = vmatprep.subr.mxu0 0.0
    %235 = vmatpush1.msra.mxu0 0.0
    %236 = vmatprep.subr.mxu0 0.0
    %237 = vmatpush1.msra.mxu0 0.0
    %238 = vmatprep.subr.mxu0 0.0
    %239 = vmatpush1.msra.mxu0 0.0
    %240 = vmatprep.subr.mxu0 0.0
    %241 = vmatpush1.msra.mxu0 0.0
    %242 = vmatprep.subr.mxu0 0.0
    %243 = vmatpush1.msra.mxu0 0.0
    %244 = vmatprep.subr.mxu0 0.0
    %245 = vmatpush1.msra.mxu0 0.0
    %246 = vmatprep.subr.mxu0 0.0
    %247 = vmatpush1.msra.mxu0 0.0
    %248 = vmatprep.subr.mxu0 0.0
    %249 = vmatpush1.msra.mxu0 0.0
    %250 = vmatprep.subr.mxu0 0.0
    %251 = vmatpush1.msra.mxu0 0.0
    %252 = vmatprep.subr.mxu0 0.0
    %253 = vmatpush1.msra.mxu0 0.0
    %254 = vmatprep.subr.mxu0 0.0
    %255 = vmatpush1.msra.mxu0 0.0
    %256 = vmatprep.subr.mxu0 0.0
    %257 = vmatpush1.msra.mxu0 0.0
    %258 = vmatprep.subr.mxu0 0.0
    %259 = vmatpush1.msra.mxu0 0.0
    %260 = vmatprep.subr.mxu0 0.0
    %261 = vmatpush1.msra.mxu0 0.0
    %262 = vmatprep.subr.mxu0 0.0
    %263 = vmatpush1.msra.mxu0 0.0
    %264 = vmatprep.subr.mxu0 0.0
    %265 = vmatpush1.msra.mxu0 0.0
    %266 = vmatprep.subr.mxu0 0.0
    %267 = vmatpush1.msra.mxu0 0.0
    %268 = vmatprep.subr.mxu0 0.0
    %269 = vmatpush1.msra.mxu0 0.0
    %270 = vmatprep.subr.mxu0 0.0
    %271 = vmatpush1.msra.mxu0 0.0
    %272 = vmatprep.subr.mxu0 0.0
    %273 = vmatpush1.msra.mxu0 0.0
    %274 = vmatprep.subr.mxu0 0.0
    %275 = vmatpush1.msra.mxu0 0.0
    %276 = vmatprep.subr.mxu0 0.0
    %277 = vmatpush1.msra.mxu0 0.0
    %278 = vmatprep.mubr.f32.mxu0 0.0
    %279 = vmatmul.mubr.f32.gmra.mrb[0].mxu0 %v209
    %v280 = vpop.f32.mrb[0].mxu0
    %v281 = vadd.f32 0.0, %v280
    %v282 = vpop.f32.mrb[0].mxu0
    %283 = vmatprep.mubr.f32.mxu0 0.0
    %284 = vmatmul.mubr.f32.gmra.mrb[0].mxu0 %v212
    %v285 = vpop.f32.mrb[0].mxu0
    %v286 = vadd.f32 0.0, %v285
    %v287 = vpop.f32.mrb[0].mxu0
    %288 = vdwg.mxu0
    %v289 = vtanh.pop %v281
    %v290 = vtanh.pop %v286
    %v291 = vld [vmem:[%s6] sm:$0x1]
    %v293 = vlaneseq
    %v294 = vshrl.u32 %v293, 7
    %v295 = vsub.s32 0, %v294
    %v296 = vrot.slane %v291, %v295
    %v298 = vmul.f32 %v202, %v296
    %v299 = vmul.f32 %v203, %v296
    %v300 = vsel %vm120, %v298, 0.0
    %301 = vadd.xlane.f32.xlu0 %v300
    %v302 = vpop.xlane.xlu0 %301
    %v303 = vsel %vm120, %v299, 0.0
    %304 = vadd.xlane.f32.xlu0 %v303
    %v305 = vpop.xlane.xlu0 %304
    %v306 = vld [vmem:[%s7] sm:$0x1]
    %v308 = vlaneseq
    %v309 = vshrl.u32 %v308, 7
    %v310 = vsub.s32 0, %v309
    %v311 = vrot.slane %v306, %v310
    %v313 = vmul.f32 %v289, %v311
    %v314 = vmul.f32 %v290, %v311
    %v315 = vsel %vm120, %v313, 0.0
    %316 = vadd.xlane.f32.xlu0 %v315
    %v317 = vpop.xlane.xlu0 %316
    %v318 = vsel %vm120, %v314, 0.0
    %319 = vadd.xlane.f32.xlu0 %v318
    %v320 = vpop.xlane.xlu0 %319
    %v321 = vadd.f32 %v302, %v317
    %v322 = vadd.f32 %v305, %v320
    %v325 = vlaneseq
    %v326 = vand.u32 %v325, 127
    %v327 = vlaneseq
    %v328 = vshrl.u32 %v327, 7
    %v329 = vsub.s32 %v326, %v328
    %v330 = vrot.slane %v321, %v329
    %v331 = vlaneseq
    %v332 = vshrl.u32 %v331, 7
    %v333 = vsub.s32 %v326, %v332
    %v334 = vrot.slane %v322, %v333
    %vm335 = vcmask 1041409
    %v336 = vsel %vm335, %v334, %v330
    %vm338 = vcmask 58368
    %v339 = vsel %vm338, %v336, -inf
    %340 = vmax.xlane.f32.xlu0 %v339
    %v341 = vpop.xlane.xlu0 %340
    %v343 = vlaneseq
    %v344 = vshrl.u32 %v343, 7
    %v345 = vsub.s32 0, %v344
    %v346 = vrot.slane %v341, %v345
    %v347 = vlaneseq
    %v348 = vshrl.u32 %v347, 7
    %v349 = vsub.s32 1, %v348
    %v350 = vrot.slane %v341, %v349
    %v353 = vsub.f32 %v321, %v346
    %v354 = vsub.f32 %v322, %v350
    %v355 = vmul.f32 %v353, 1.442695
    %v356 = vpow.pop %v355
    %v357 = vmul.f32 %v354, 1.442695
    %v358 = vpow.pop %v357
    %361 = vset.pattern.permute.xlu0 0
    %362 = vperm.xlu0 %361, %v356
    %v363 = vpop.permute.xlu0 %362
    %364 = vset.pattern.permute.xlu0 0
    %365 = vperm.xlu0 %364, %v358
    %v366 = vpop.permute.xlu0 %365
    %v367 = vlaneseq
    %v368 = vshrl.u32 %v367, 7
    %v369 = vsub.s32 %v326, %v368
    %v370 = vrot.slane %v363, %v369
    %v371 = vlaneseq
    %v372 = vshrl.u32 %v371, 7
    %v373 = vsub.s32 %v326, %v372
    %v374 = vrot.slane %v366, %v373
    %v375 = vsel %vm335, %v374, %v370
    %v377 = vsel %vm338, %v375, 0.0
    %378 = vadd.xlane.f32.xlu0 %v377
    %v379 = vpop.xlane.xlu0 %378
    %v381 = vlaneseq
    %v382 = vshrl.u32 %v381, 7
    %v383 = vsub.s32 0, %v382
    %v384 = vrot.slane %v379, %v383
    %v385 = vlaneseq
    %v386 = vshrl.u32 %v385, 7
    %v387 = vsub.s32 1, %v386
    %v388 = vrot.slane %v379, %v387
    %v391 = vrcp.pop %v384
    %v392 = vmul.f32 %v356, %v391
    %v393 = vrcp.pop %v388
    %v394 = vmul.f32 %v358, %v393
    %396 = vset.pattern.permute.xlu0 0
    %397 = vperm.xlu0 %396, %v392
    %v398 = vpop.permute.xlu0 %397
    %401 = vset.pattern.permute.xlu0 0
    %402 = vperm.xlu0 %401, %v394
    %v403 = vpop.permute.xlu0 %402
    %v405 = vmul.f32 %v398, %v112
    %v406 = vmul.f32 %v403, %v113
    %v407 = vsel %vm120, %v405, 0.0
    %v408 = vrot.slane %v407, 4
    %v409 = vadd.f32 %v407, %v408
    %v410 = vrot.slane %v409, 2
    %v411 = vadd.f32 %v409, %v410
    %v412 = vrot.slane %v411, 1
    %v413 = vadd.f32 %v411, %v412
    %v414 = vsel %vm120, %v406, 0.0
    %v415 = vrot.slane %v414, 4
    %v416 = vadd.f32 %v414, %v415
    %v417 = vrot.slane %v416, 2
    %v418 = vadd.f32 %v416, %v417
    %v419 = vrot.slane %v418, 1
    %v420 = vadd.f32 %v418, %v419
    %v421 = vld [vmem:[#allocation10] sm:$0xff]
    %v422 = vld [vmem:[#allocation10 + $0x8] sm:$0xff]
    %v423 = vld [vmem:[#allocation10 + $0x10] sm:$0xff]
    %v424 = vld [vmem:[#allocation10 + $0x18] sm:$0xff]
    %v425 = vld [vmem:[#allocation11] sm:$0xff]
    %v426 = vld [vmem:[#allocation11 + $0x8] sm:$0xff]
    %v427 = vld [vmem:[#allocation11 + $0x10] sm:$0xff]
    %v428 = vld [vmem:[#allocation11 + $0x18] sm:$0xff]
    %v429 = vrot.slane %v112, 7
    %v430 = vrot.slane %v113, 6
    %v431 = vsel %vm335, %v430, %v429
    %v432 = vsel %vm120, %v431, 0
    %434 = vmatprep.subr.mxu0 0.0
    %435 = vmatpush1.msra.mxu0 %v425
    %436 = vmatprep.subr.mxu0 0.0
    %437 = vmatpush1.msra.mxu0 %v426
    %438 = vmatprep.subr.mxu0 0.0
    %439 = vmatpush1.msra.mxu0 %v427
    %440 = vmatprep.subr.mxu0 0.0
    %441 = vmatpush1.msra.mxu0 %v428
    %442 = vmatprep.subr.mxu0 0.0
    %443 = vmatpush1.msra.mxu0 0.0
    %444 = vmatprep.subr.mxu0 0.0
    %445 = vmatpush1.msra.mxu0 0.0
    %446 = vmatprep.subr.mxu0 0.0
    %447 = vmatpush1.msra.mxu0 0.0
    %448 = vmatprep.subr.mxu0 0.0
    %449 = vmatpush1.msra.mxu0 0.0
    %450 = vmatprep.subr.mxu0 0.0
    %451 = vmatpush1.msra.mxu0 0.0
    %452 = vmatprep.subr.mxu0 0.0
    %453 = vmatpush1.msra.mxu0 0.0
    %454 = vmatprep.subr.mxu0 0.0
    %455 = vmatpush1.msra.mxu0 0.0
    %456 = vmatprep.subr.mxu0 0.0
    %457 = vmatpush1.msra.mxu0 0.0
    %458 = vmatprep.subr.mxu0 0.0
    %459 = vmatpush1.msra.mxu0 0.0
    %460 = vmatprep.subr.mxu0 0.0
    %461 = vmatpush1.msra.mxu0 0.0
    %462 = vmatprep.subr.mxu0 0.0
    %463 = vmatpush1.msra.mxu0 0.0
    %464 = vmatprep.subr.mxu0 0.0
    %465 = vmatpush1.msra.mxu0 0.0
    %466 = vmatprep.subr.mxu0 0.0
    %467 = vmatpush1.msra.mxu0 0.0
    %468 = vmatprep.subr.mxu0 0.0
    %469 = vmatpush1.msra.mxu0 0.0
    %470 = vmatprep.subr.mxu0 0.0
    %471 = vmatpush1.msra.mxu0 0.0
    %472 = vmatprep.subr.mxu0 0.0
    %473 = vmatpush1.msra.mxu0 0.0
    %474 = vmatprep.subr.mxu0 0.0
    %475 = vmatpush1.msra.mxu0 0.0
    %476 = vmatprep.subr.mxu0 0.0
    %477 = vmatpush1.msra.mxu0 0.0
    %478 = vmatprep.subr.mxu0 0.0
    %479 = vmatpush1.msra.mxu0 0.0
    %480 = vmatprep.subr.mxu0 0.0
    %481 = vmatpush1.msra.mxu0 0.0
    %482 = vmatprep.subr.mxu0 0.0
    %483 = vmatpush1.msra.mxu0 0.0
    %484 = vmatprep.subr.mxu0 0.0
    %485 = vmatpush1.msra.mxu0 0.0
    %486 = vmatprep.subr.mxu0 0.0
    %487 = vmatpush1.msra.mxu0 0.0
    %488 = vmatprep.subr.mxu0 0.0
    %489 = vmatpush1.msra.mxu0 0.0
    %490 = vmatprep.subr.mxu0 0.0
    %491 = vmatpush1.msra.mxu0 0.0
    %492 = vmatprep.subr.mxu0 0.0
    %493 = vmatpush1.msra.mxu0 0.0
    %494 = vmatprep.subr.mxu0 0.0
    %495 = vmatpush1.msra.mxu0 0.0
    %496 = vmatprep.subr.mxu0 0.0
    %497 = vmatpush1.msra.mxu0 0.0
    %498 = vmatprep.mubr.f32.mxu0 0.0
    %499 = vmatmul.mubr.f32.gmra.mrb[0].mxu0 %v432
    %v500 = vpop.f32.mrb[0].mxu0
    %v501 = vadd.f32 0.0, %v500
    %v502 = vpop.f32.mrb[0].mxu0
    %503 = vdwg.mxu0
    %v506 = vsel %vm335, %v420, %v413
    %v507 = vsel %vm120, %v506, 0
    %509 = vmatprep.subr.mxu0 0.0
    %510 = vmatpush1.msra.mxu0 %v421
    %511 = vmatprep.subr.mxu0 0.0
    %512 = vmatpush1.msra.mxu0 %v422
    %513 = vmatprep.subr.mxu0 0.0
    %514 = vmatpush1.msra.mxu0 %v423
    %515 = vmatprep.subr.mxu0 0.0
    %516 = vmatpush1.msra.mxu0 %v424
    %517 = vmatprep.subr.mxu0 0.0
    %518 = vmatpush1.msra.mxu0 0.0
    %519 = vmatprep.subr.mxu0 0.0
    %520 = vmatpush1.msra.mxu0 0.0
    %521 = vmatprep.subr.mxu0 0.0
    %522 = vmatpush1.msra.mxu0 0.0
    %523 = vmatprep.subr.mxu0 0.0
    %524 = vmatpush1.msra.mxu0 0.0
    %525 = vmatprep.subr.mxu0 0.0
    %526 = vmatpush1.msra.mxu0 0.0
    %527 = vmatprep.subr.mxu0 0.0
    %528 = vmatpush1.msra.mxu0 0.0
    %529 = vmatprep.subr.mxu0 0.0
    %530 = vmatpush1.msra.mxu0 0.0
    %531 = vmatprep.subr.mxu0 0.0
    %532 = vmatpush1.msra.mxu0 0.0
    %533 = vmatprep.subr.mxu0 0.0
    %534 = vmatpush1.msra.mxu0 0.0
    %535 = vmatprep.subr.mxu0 0.0
    %536 = vmatpush1.msra.mxu0 0.0
    %537 = vmatprep.subr.mxu0 0.0
    %538 = vmatpush1.msra.mxu0 0.0
    %539 = vmatprep.subr.mxu0 0.0
    %540 = vmatpush1.msra.mxu0 0.0
    %541 = vmatprep.subr.mxu0 0.0
    %542 = vmatpush1.msra.mxu0 0.0
    %543 = vmatprep.subr.mxu0 0.0
    %544 = vmatpush1.msra.mxu0 0.0
    %545 = vmatprep.subr.mxu0 0.0
    %546 = vmatpush1.msra.mxu0 0.0
    %547 = vmatprep.subr.mxu0 0.0
    %548 = vmatpush1.msra.mxu0 0.0
    %549 = vmatprep.subr.mxu0 0.0
    %550 = vmatpush1.msra.mxu0 0.0
    %551 = vmatprep.subr.mxu0 0.0
    %552 = vmatpush1.msra.mxu0 0.0
    %553 = vmatprep.subr.mxu0 0.0
    %554 = vmatpush1.msra.mxu0 0.0
    %555 = vmatprep.subr.mxu0 0.0
    %556 = vmatpush1.msra.mxu0 0.0
    %557 = vmatprep.subr.mxu0 0.0
    %558 = vmatpush1.msra.mxu0 0.0
    %559 = vmatprep.subr.mxu0 0.0
    %560 = vmatpush1.msra.mxu0 0.0
    %561 = vmatprep.subr.mxu0 0.0
    %562 = vmatpush1.msra.mxu0 0.0
    %563 = vmatprep.subr.mxu0 0.0
    %564 = vmatpush1.msra.mxu0 0.0
    %565 = vmatprep.subr.mxu0 0.0
    %566 = vmatpush1.msra.mxu0 0.0
    %567 = vmatprep.subr.mxu0 0.0
    %568 = vmatpush1.msra.mxu0 0.0
    %569 = vmatprep.subr.mxu0 0.0
    %570 = vmatpush1.msra.mxu0 0.0
    %571 = vmatprep.subr.mxu0 0.0
    %572 = vmatpush1.msra.mxu0 0.0
    %573 = vmatprep.mubr.f32.mxu0 0.0
    %574 = vmatmul.mubr.f32.gmra.mrb[0].mxu0 %v507
    %v575 = vpop.f32.mrb[0].mxu0
    %v576 = vadd.f32 %v501, %v575
    %v577 = vpop.f32.mrb[0].mxu0
    %578 = vdwg.mxu0
    %v579 = vtanh.pop %v576
    %vm580 = vcmask 254976
    %581 = vst.msk [vmem:[#allocation13] sm:$0x3] %vm580, %v579
    // Predicated region
    $region58: #{tpu_custom_call.1} parent=1 // pred_check
      _
    $region59: #{tpu_custom_call.1} parent=1 // pred_check_branch
      %583 = sbr.rel (0) target = $region61
    $region60: #{tpu_custom_call.1} parent=1 // pred_region
      %s585 = ssub.s32 32, 32
      %586 = vsyncadd [#allocation4], %s585
      %s588 = sshll.u32 [#allocation13], 4
      %s589 = int_to_ptr.vmem [resolvable:$true] %s588
      %591 = dma.vmem_to_hbm [thread:$0]  %s589, 32, %s8, [#allocation4]
    $region61: #{tpu_custom_call.1} parent=1 // pred_fallthru
      _
    // Predicated region
    $region62: #{tpu_custom_call.1} parent=1 // pred_check
      _
    $region63: #{tpu_custom_call.1} parent=1 // pred_check_branch
      %593 = sbr.rel (0) target = $region65
    $region64: #{tpu_custom_call.1} parent=1 // pred_region
      %594 = dma.done [#allocation4], 32
    $region65: #{tpu_custom_call.1} parent=1 // pred_fallthru
      _
    %595 = vsyncpa [#allocation3], 1
    %596 = vsyncpa [#allocation6], 1
    %597 = vsyncpa [#allocation9], 1
    %598 = vsyncpa [#allocation12], 1
    %599 = vsyncpa [#allocation4], 1

</llo_original>
